<compile_context>
chip_gen: v5e
topology: v5e:2x2
jax: 0.10.0
libtpu: 0.0.40
codegen_flags: <defaults>
</compile_context>

<pallas_src>
import math

import jax
import jax.numpy as jnp
from jax.experimental import pallas as pl
from jax.experimental.pallas import tpu as pltpu


def _round_up(x, m):
    return (x + m - 1) // m * m


def _make_arcface_kernel(la, cos_m, sin_m, th, mm, easy_margin,
                         cN_actual, tile_n, mxu_dtype):
    def kernel(x_ref, wcd_ref, bcd_ref, fc_ref, tgt_ref,
               cos_ref, ce_ref,
               hn_sc, m_sc, l_sc, t_sc):
        n = pl.program_id(1)
        n_last = pl.num_programs(1) - 1

        # ---- once per batch tile: change_dim linear + L2 row normalize ----
        @pl.when(n == 0)
        def _():
            h = jnp.dot(x_ref[...], wcd_ref[...],
                        preferred_element_type=jnp.float32) + bcd_ref[...]
            ssq = jnp.sum(h * h, axis=1, keepdims=True)
            hn_sc[...] = h * jax.lax.rsqrt(jnp.maximum(ssq, 1e-24))
            m_sc[...] = jnp.full_like(m_sc, -jnp.inf)
            l_sc[...] = jnp.zeros_like(l_sc)
            t_sc[...] = jnp.zeros_like(t_sc)

        # ---- per class tile: normalize this slice of fc (tile-local) ----
        fc = fc_ref[...]                                        # (dim, tile_n)
        csq = jnp.sum(fc * fc, axis=0, keepdims=True)
        centers = fc * jax.lax.rsqrt(jnp.maximum(csq, 1e-24))

        hn = hn_sc[...]
        cosine = jnp.dot(hn.astype(mxu_dtype), centers.astype(mxu_dtype),
                         preferred_element_type=jnp.float32)    # (tile_b, tile_n)

        # ---- arcface margin (all f32 on the VPU) ----
        sine = jnp.sqrt(jnp.clip(1.0 - cosine * cosine, 0.0, 1.0))
        phi = cosine * cos_m - sine * sin_m
        if easy_margin:
            phi = jnp.where(cosine > 0.0, phi, cosine)
        else:
            phi = jnp.where(cosine > th, phi, cosine - mm)

        tile_b = cosine.shape[0]
        col = (jax.lax.broadcasted_iota(jnp.int32, (tile_b, tile_n), 1)
               + n * tile_n)                                    # global class idx
        tgt = tgt_ref[...]                                      # (tile_b, 1) int32
        is_tgt = col == tgt
        valid = col < cN_actual                                 # mask padded classes

        # boolean select instead of float one_hot; fuse the * la scale
        logits = jnp.where(is_tgt, phi, cosine) * la
        logits_sm = jnp.where(valid, logits, -jnp.inf)

        # ---- online-softmax cross-entropy accumulation over class tiles ----
        m_prev = m_sc[...]
        m_new = jnp.maximum(m_prev, jnp.max(logits_sm, axis=1, keepdims=True))
        alpha = jnp.exp(m_prev - m_new)
        p = jnp.exp(logits_sm - m_new)
        l_sc[...] = alpha * l_sc[...] + jnp.sum(p, axis=1, keepdims=True)
        m_sc[...] = m_new
        # target column lives in exactly one class tile -> masked accumulate
        t_sc[...] = t_sc[...] + jnp.sum(
            jnp.where(is_tgt, logits, 0.0), axis=1, keepdims=True)

        # lane-dense store of cosine * la for this (batch, class) tile
        cos_ref[...] = cosine * la

        # ---- finalize per-sample CE on the last class tile ----
        @pl.when(n == n_last)
        def _():
            lse = m_sc[...] + jnp.log(l_sc[...])
            per_sample = lse - t_sc[...]                        # (tile_b, 1)
            ce_ref[...] = jnp.broadcast_to(per_sample, ce_ref.shape)

    return kernel


def arcface_forward(x, w_cd, b_cd, fc, target, positive_weight,
                    *, la, margin, easy_margin=False,
                    mxu_dtype=jnp.float32):
    """Arcface forward: returns (loss, cosine * la).

    mxu_dtype: set to jnp.bfloat16 on v6e/v7x at large (dim, cN) to halve the
    fc-tile DMA bytes and feed the MXU bf16 (accumulation stays f32).
    """
    # TODO(synk): ori_dim=None (no change_dim Linear) path not implemented.
    B, ori_dim = x.shape
    dim, cN = fc.shape
    cos_m = math.cos(margin)
    sin_m = math.sin(margin)
    th = math.cos(math.pi - margin)
    mm = math.sin(math.pi - margin) * margin

    # Lane-dense tiling: class dim padded to a multiple of 128, batch to 8.
    tile_n = 512 if cN >= 512 else _round_up(cN, 128)
    cN_pad = _round_up(cN, tile_n)
    tile_b = 128 if B >= 128 else _round_up(B, 8)
    B_pad = _round_up(B, tile_b)
    nb = B_pad // tile_b
    nn = cN_pad // tile_n

    f32 = jnp.float32
    x_p = jnp.zeros((B_pad, ori_dim), f32).at[:B].set(x.astype(f32))
    fc_p = jnp.zeros((dim, cN_pad), f32).at[:, :cN].set(fc.astype(f32))
    tgt_p = jnp.zeros((B_pad, 1), jnp.int32).at[:B, 0].set(
        target.astype(jnp.int32))
    b2d = b_cd.reshape(1, dim).astype(f32)
    wcd = w_cd.astype(f32)

    kernel = _make_arcface_kernel(la, cos_m, sin_m, th, mm, easy_margin,
                                  cN, tile_n, mxu_dtype)

    cos_out, ce_out = pl.pallas_call(
        kernel,
        out_shape=(
            jax.ShapeDtypeStruct((B_pad, cN_pad), f32),   # cosine * la
            jax.ShapeDtypeStruct((B_pad, 128), f32),      # per-sample CE (col 0)
        ),
        grid_spec=pltpu.PrefetchScalarGridSpec(
            num_scalar_prefetch=0,
            grid=(nb, nn),                                 # (batch tiles, class tiles)
            in_specs=[
                pl.BlockSpec((tile_b, ori_dim), lambda b, n: (b, 0)),   # x
                pl.BlockSpec((ori_dim, dim), lambda b, n: (0, 0)),      # w_cd
                pl.BlockSpec((1, dim), lambda b, n: (0, 0)),            # b_cd
                pl.BlockSpec((dim, tile_n), lambda b, n: (0, n)),       # fc tile
                pl.BlockSpec((tile_b, 1), lambda b, n: (b, 0)),         # target
            ],
            out_specs=[
                pl.BlockSpec((tile_b, tile_n), lambda b, n: (b, n)),    # cos*la
                pl.BlockSpec((tile_b, 128), lambda b, n: (b, 0)),       # CE stats
            ],
            scratch_shapes=[
                pltpu.VMEM((tile_b, dim), f32),   # normalized input (resident)
                pltpu.VMEM((tile_b, 1), f32),     # running max m
                pltpu.VMEM((tile_b, 1), f32),     # running sum-exp l
                pltpu.VMEM((tile_b, 1), f32),     # target logit
            ],
        ),
        compiler_params=pltpu.CompilerParams(
            dimension_semantics=("parallel", "arbitrary")),
    )(x_p, wcd, b2d, fc_p, tgt_p)

    # Tiny weighted mean over B (F.cross_entropy with weight, reduction='mean')
    per_sample = ce_out[:B, 0]
    pw = positive_weight.astype(f32)
    w_i = pw[target]
    loss = jnp.sum(w_i * per_sample) / jnp.sum(w_i)
    cos_la = cos_out[:B, :cN]
    return loss, cos_la


def _reference(x, w_cd, b_cd, fc, target, pw, *, la, margin, easy_margin=False):
    cos_m, sin_m = math.cos(margin), math.sin(margin)
    th = math.cos(math.pi - margin)
    mm = math.sin(math.pi - margin) * margin
    h = x @ w_cd + b_cd[None, :]
    hn = h / jnp.maximum(jnp.linalg.norm(h, axis=1, keepdims=True), 1e-12)
    centers = fc / jnp.maximum(jnp.linalg.norm(fc, axis=0, keepdims=True), 1e-12)
    cosine = hn @ centers
    sine = jnp.sqrt(jnp.clip(1.0 - cosine ** 2, 0.0, 1.0))
    phi = cosine * cos_m - sine * sin_m
    phi = jnp.where(cosine > 0, phi, cosine) if easy_margin else \
        jnp.where(cosine > th, phi, cosine - mm)
    one_hot = jax.nn.one_hot(target, cosine.shape[1], dtype=jnp.float32)
    out = (one_hot * phi + (1.0 - one_hot) * cosine) * la
    logp = jax.nn.log_softmax(out, axis=1)
    per = -jnp.sum(one_hot * logp, axis=1)
    w_i = pw[target]
    loss = jnp.sum(w_i * per) / jnp.sum(w_i)
    return loss, cosine * la


if __name__ == "__main__":
    # Module hyperparams (small demo shapes)
    la = 30.0
    margin = 0.5
    ori_dim = 32
    dim = 16
    cN = 8
    B = 8

    key = jax.random.PRNGKey(0)
    k1, k2, k3, k4, k5 = jax.random.split(key, 5)

    # Deterministic "kaiming-uniform-like" parameter init (shapes from __init__).
    fc = jax.random.uniform(k1, (dim, cN), jnp.float32,
                            -1.0 / math.sqrt(cN), 1.0 / math.sqrt(cN))
    w_cd = jax.random.uniform(k2, (ori_dim, dim), jnp.float32,
                              -1.0 / math.sqrt(ori_dim), 1.0 / math.sqrt(ori_dim))
    b_cd = jax.random.uniform(k3, (dim,), jnp.float32,
                              -1.0 / math.sqrt(ori_dim), 1.0 / math.sqrt(ori_dim))
    positive_weight = jnp.ones((cN,), jnp.float32)

    x = jax.random.normal(k4, (B, ori_dim), jnp.float32)
    target = jax.random.randint(k5, (B,), 0, cN, dtype=jnp.int32)

    loss, cos_la = arcface_forward(x, w_cd, b_cd, fc, target, positive_weight,
                                   la=la, margin=margin, easy_margin=False)
    jax.block_until_ready((loss, cos_la))

    ref_loss, ref_cos = _reference(x, w_cd, b_cd, fc, target, positive_weight,
                                   la=la, margin=margin, easy_margin=False)
    assert jnp.allclose(loss, ref_loss, atol=1e-4, rtol=1e-4), (loss, ref_loss)
    assert jnp.allclose(cos_la, ref_cos, atol=1e-4, rtol=1e-4)

    print("KERNEL_OK")
</pallas_src>

<mosaic_0001>
module attributes {stable_mosaic.version = 11 : i64} {
  func.func @kernel(%arg0: i32, %arg1: i32, %arg2: memref<8x32xf32, #tpu.memory_space<vmem>>, %arg3: memref<32x16xf32, #tpu.memory_space<vmem>>, %arg4: memref<1x16xf32, #tpu.memory_space<vmem>>, %arg5: memref<16x128xf32, #tpu.memory_space<vmem>>, %arg6: memref<8x1xi32, #tpu.memory_space<vmem>>, %arg7: memref<8x128xf32, #tpu.memory_space<vmem>>, %arg8: memref<8x128xf32, #tpu.memory_space<vmem>>, %arg9: memref<8x16xf32, #tpu.memory_space<vmem>>, %arg10: memref<8x1xf32, #tpu.memory_space<vmem>>, %arg11: memref<8x1xf32, #tpu.memory_space<vmem>>, %arg12: memref<8x1xf32, #tpu.memory_space<vmem>>) attributes {dimension_semantics = [#tpu.dimension_semantics<parallel>, #tpu.dimension_semantics<arbitrary>], iteration_bounds = array<i64: 1, 1>, scalar_prefetch = 0 : i64, scratch_operands = 4 : i64, tpu.core_type = #tpu.core_type<tc>, window_params = [{transform_indices = @transform_0, window_bounds = array<i64: 8, 32>}, {pipeline_mode = #tpu.pipeline_mode<synchronous>, transform_indices = @transform_1, window_bounds = array<i64: 32, 16>}, {pipeline_mode = #tpu.pipeline_mode<synchronous>, transform_indices = @transform_2, window_bounds = array<i64: 1, 16>}, {transform_indices = @transform_3, window_bounds = array<i64: 16, 128>}, {transform_indices = @transform_4, window_bounds = array<i64: 8, 1>}, {transform_indices = @transform_5, window_bounds = array<i64: 8, 128>}, {transform_indices = @transform_6, window_bounds = array<i64: 8, 128>}]} {
    %c0_i32 = arith.constant 0 : i32
    %0 = arith.cmpi eq, %arg1, %c0_i32 : i32
    %1 = arith.extui %0 : i1 to i32
    %c0_i32_0 = arith.constant 0 : i32
    %2 = arith.cmpi ne, %1, %c0_i32_0 : i32
    scf.if %2 {
      %c0_38 = arith.constant 0 : index
      %c0_39 = arith.constant 0 : index
      %75 = vector.load %arg2[%c0_38, %c0_39] : memref<8x32xf32, #tpu.memory_space<vmem>>, vector<8x32xf32>
      %c0_40 = arith.constant 0 : index
      %c0_41 = arith.constant 0 : index
      %76 = vector.load %arg3[%c0_40, %c0_41] : memref<32x16xf32, #tpu.memory_space<vmem>>, vector<32x16xf32>
      %cst_42 = arith.constant dense<0.000000e+00> : vector<8x16xf32>
      %77 = tpu.matmul %75, %76, %cst_42 {dimension_numbers = #tpu.dot_dimension_numbers<[1], [0], [0], [1], [0, 0, 1, 1], [], []>} : vector<8x32xf32>, vector<32x16xf32>, vector<8x16xf32> -> vector<8x16xf32>
      %c0_43 = arith.constant 0 : index
      %c0_44 = arith.constant 0 : index
      %78 = vector.load %arg4[%c0_43, %c0_44] : memref<1x16xf32, #tpu.memory_space<vmem>>, vector<1x16xf32>
      %79 = vector.broadcast %78 : vector<1x16xf32> to vector<8x16xf32>
      %80 = arith.addf %77, %79 : vector<8x16xf32>
      %81 = arith.mulf %80, %80 : vector<8x16xf32>
      %cst_45 = arith.constant dense<0.000000e+00> : vector<8xf32>
      %82 = vector.multi_reduction <add>, %81, %cst_45 [1] : vector<8x16xf32> to vector<8xf32>
      %83 = vector.shape_cast %82 : vector<8xf32> to vector<8x1xf32>
      %cst_46 = arith.constant 1.000000e-24 : f32
      %84 = vector.broadcast %cst_46 : f32 to vector<8x1xf32>
      %85 = arith.maximumf %83, %84 : vector<8x1xf32>
      %86 = math.rsqrt %85 : vector<8x1xf32>
      %87 = vector.broadcast %86 : vector<8x1xf32> to vector<8x16xf32>
      %88 = arith.mulf %80, %87 : vector<8x16xf32>
      %c0_47 = arith.constant 0 : index
      %c0_48 = arith.constant 0 : index
      %89 = vector.load %arg9[%c0_47, %c0_48] : memref<8x16xf32, #tpu.memory_space<vmem>>, vector<8x16xf32>
      tpu.vector_store %arg9[%c0_47, %c0_48], %88 {strides = array<i32>} : memref<8x16xf32, #tpu.memory_space<vmem>>, vector<8x16xf32>,
      %cst_49 = arith.constant 0xFF800000 : f32
      %90 = vector.broadcast %cst_49 : f32 to vector<8x1xf32>
      %c0_50 = arith.constant 0 : index
      %c0_51 = arith.constant 0 : index
      %91 = vector.load %arg10[%c0_50, %c0_51] : memref<8x1xf32, #tpu.memory_space<vmem>>, vector<8x1xf32>
      tpu.vector_store %arg10[%c0_50, %c0_51], %90 {strides = array<i32>} : memref<8x1xf32, #tpu.memory_space<vmem>>, vector<8x1xf32>,
      %cst_52 = arith.constant 0.000000e+00 : f32
      %92 = vector.broadcast %cst_52 : f32 to vector<8x1xf32>
      %c0_53 = arith.constant 0 : index
      %c0_54 = arith.constant 0 : index
      %93 = vector.load %arg11[%c0_53, %c0_54] : memref<8x1xf32, #tpu.memory_space<vmem>>, vector<8x1xf32>
      tpu.vector_store %arg11[%c0_53, %c0_54], %92 {strides = array<i32>} : memref<8x1xf32, #tpu.memory_space<vmem>>, vector<8x1xf32>,
      %cst_55 = arith.constant 0.000000e+00 : f32
      %94 = vector.broadcast %cst_55 : f32 to vector<8x1xf32>
      %c0_56 = arith.constant 0 : index
      %c0_57 = arith.constant 0 : index
      %95 = vector.load %arg12[%c0_56, %c0_57] : memref<8x1xf32, #tpu.memory_space<vmem>>, vector<8x1xf32>
      tpu.vector_store %arg12[%c0_56, %c0_57], %94 {strides = array<i32>} : memref<8x1xf32, #tpu.memory_space<vmem>>, vector<8x1xf32>,
    } else {
    }
    %c0 = arith.constant 0 : index
    %c0_1 = arith.constant 0 : index
    %3 = vector.load %arg5[%c0, %c0_1] : memref<16x128xf32, #tpu.memory_space<vmem>>, vector<16x128xf32>
    %4 = arith.mulf %3, %3 : vector<16x128xf32>
    %cst = arith.constant dense<0.000000e+00> : vector<128xf32>
    %5 = vector.multi_reduction <add>, %4, %cst [0] : vector<16x128xf32> to vector<128xf32>
    %6 = vector.shape_cast %5 : vector<128xf32> to vector<1x128xf32>
    %cst_2 = arith.constant 1.000000e-24 : f32
    %7 = vector.broadcast %cst_2 : f32 to vector<1x128xf32>
    %8 = arith.maximumf %6, %7 : vector<1x128xf32>
    %9 = math.rsqrt %8 : vector<1x128xf32>
    %10 = vector.broadcast %9 : vector<1x128xf32> to vector<16x128xf32>
    %11 = arith.mulf %3, %10 : vector<16x128xf32>
    %c0_3 = arith.constant 0 : index
    %c0_4 = arith.constant 0 : index
    %12 = vector.load %arg9[%c0_3, %c0_4] : memref<8x16xf32, #tpu.memory_space<vmem>>, vector<8x16xf32>
    %cst_5 = arith.constant dense<0.000000e+00> : vector<8x128xf32>
    %13 = tpu.matmul %12, %11, %cst_5 {dimension_numbers = #tpu.dot_dimension_numbers<[1], [0], [0], [1], [0, 0, 1, 1], [], []>} : vector<8x16xf32>, vector<16x128xf32>, vector<8x128xf32> -> vector<8x128xf32>
    %14 = arith.mulf %13, %13 : vector<8x128xf32>
    %cst_6 = arith.constant 1.000000e+00 : f32
    %15 = vector.broadcast %cst_6 : f32 to vector<8x128xf32>
    %16 = arith.subf %15, %14 : vector<8x128xf32>
    %cst_7 = arith.constant 0.000000e+00 : f32
    %cst_8 = arith.constant 1.000000e+00 : f32
    %17 = vector.broadcast %cst_7 : f32 to vector<8x128xf32>
    %18 = arith.maximumf %17, %16 : vector<8x128xf32>
    %19 = vector.broadcast %cst_8 : f32 to vector<8x128xf32>
    %20 = arith.minimumf %19, %18 : vector<8x128xf32>
    %21 = math.sqrt %20 : vector<8x128xf32>
    %cst_9 = arith.constant 0.87758255 : f32
    %22 = vector.broadcast %cst_9 : f32 to vector<8x128xf32>
    %23 = arith.mulf %13, %22 : vector<8x128xf32>
    %cst_10 = arith.constant 0.47942555 : f32
    %24 = vector.broadcast %cst_10 : f32 to vector<8x128xf32>
    %25 = arith.mulf %21, %24 : vector<8x128xf32>
    %26 = arith.subf %23, %25 : vector<8x128xf32>
    %cst_11 = arith.constant -0.87758255 : f32
    %27 = vector.broadcast %cst_11 : f32 to vector<8x128xf32>
    %28 = arith.cmpf ogt, %13, %27 : vector<8x128xf32>
    %cst_12 = arith.constant 0.239712775 : f32
    %29 = vector.broadcast %cst_12 : f32 to vector<8x128xf32>
    %30 = arith.subf %13, %29 : vector<8x128xf32>
    %31 = arith.select %28, %26, %30 : vector<8x128xi1>, vector<8x128xf32>
    %32 = tpu.iota {dimensions = array<i32: 1>} : vector<8x128xi32>
    %c128_i32 = arith.constant 128 : i32
    %33 = arith.muli %arg1, %c128_i32 : i32
    %34 = vector.broadcast %33 : i32 to vector<8x128xi32>
    %35 = arith.addi %32, %34 : vector<8x128xi32>
    %c0_13 = arith.constant 0 : index
    %c0_14 = arith.constant 0 : index
    %36 = vector.load %arg6[%c0_13, %c0_14] : memref<8x1xi32, #tpu.memory_space<vmem>>, vector<8x1xi32>
    %37 = vector.broadcast %36 : vector<8x1xi32> to vector<8x128xi32>
    %38 = arith.cmpi eq, %35, %37 : vector<8x128xi32>
    %c8_i32 = arith.constant 8 : i32
    %39 = vector.broadcast %c8_i32 : i32 to vector<8x128xi32>
    %40 = arith.cmpi slt, %35, %39 : vector<8x128xi32>
    %41 = arith.select %38, %31, %13 : vector<8x128xi1>, vector<8x128xf32>
    %cst_15 = arith.constant 3.000000e+01 : f32
    %42 = vector.broadcast %cst_15 : f32 to vector<8x128xf32>
    %43 = arith.mulf %41, %42 : vector<8x128xf32>
    %cst_16 = arith.constant 0xFF800000 : f32
    %44 = vector.broadcast %cst_16 : f32 to vector<8x128xf32>
    %45 = arith.select %40, %43, %44 : vector<8x128xi1>, vector<8x128xf32>
    %c0_17 = arith.constant 0 : index
    %c0_18 = arith.constant 0 : index
    %46 = vector.load %arg10[%c0_17, %c0_18] : memref<8x1xf32, #tpu.memory_space<vmem>>, vector<8x1xf32>
    %cst_19 = arith.constant dense<0xFF800000> : vector<8xf32>
    %47 = vector.multi_reduction <maximumf>, %45, %cst_19 [1] : vector<8x128xf32> to vector<8xf32>
    %48 = vector.shape_cast %47 : vector<8xf32> to vector<8x1xf32>
    %49 = arith.maximumf %46, %48 : vector<8x1xf32>
    %50 = arith.subf %46, %49 : vector<8x1xf32>
    %51 = math.exp %50 : vector<8x1xf32>
    %52 = vector.broadcast %49 : vector<8x1xf32> to vector<8x128xf32>
    %53 = arith.subf %45, %52 : vector<8x128xf32>
    %54 = math.exp %53 : vector<8x128xf32>
    %c0_20 = arith.constant 0 : index
    %c0_21 = arith.constant 0 : index
    %55 = vector.load %arg11[%c0_20, %c0_21] : memref<8x1xf32, #tpu.memory_space<vmem>>, vector<8x1xf32>
    %56 = arith.mulf %51, %55 : vector<8x1xf32>
    %cst_22 = arith.constant dense<0.000000e+00> : vector<8xf32>
    %57 = vector.multi_reduction <add>, %54, %cst_22 [1] : vector<8x128xf32> to vector<8xf32>
    %58 = vector.shape_cast %57 : vector<8xf32> to vector<8x1xf32>
    %59 = arith.addf %56, %58 : vector<8x1xf32>
    %c0_23 = arith.constant 0 : index
    %c0_24 = arith.constant 0 : index
    %60 = vector.load %arg11[%c0_23, %c0_24] : memref<8x1xf32, #tpu.memory_space<vmem>>, vector<8x1xf32>
    tpu.vector_store %arg11[%c0_23, %c0_24], %59 {strides = array<i32>} : memref<8x1xf32, #tpu.memory_space<vmem>>, vector<8x1xf32>,
    %c0_25 = arith.constant 0 : index
    %c0_26 = arith.constant 0 : index
    %61 = vector.load %arg10[%c0_25, %c0_26] : memref<8x1xf32, #tpu.memory_space<vmem>>, vector<8x1xf32>
    tpu.vector_store %arg10[%c0_25, %c0_26], %49 {strides = array<i32>} : memref<8x1xf32, #tpu.memory_space<vmem>>, vector<8x1xf32>,
    %c0_27 = arith.constant 0 : index
    %c0_28 = arith.constant 0 : index
    %62 = vector.load %arg12[%c0_27, %c0_28] : memref<8x1xf32, #tpu.memory_space<vmem>>, vector<8x1xf32>
    %cst_29 = arith.constant 0.000000e+00 : f32
    %63 = vector.broadcast %cst_29 : f32 to vector<8x128xf32>
    %64 = arith.select %38, %43, %63 : vector<8x128xi1>, vector<8x128xf32>
    %cst_30 = arith.constant dense<0.000000e+00> : vector<8xf32>
    %65 = vector.multi_reduction <add>, %64, %cst_30 [1] : vector<8x128xf32> to vector<8xf32>
    %66 = vector.shape_cast %65 : vector<8xf32> to vector<8x1xf32>
    %67 = arith.addf %62, %66 : vector<8x1xf32>
    %c0_31 = arith.constant 0 : index
    %c0_32 = arith.constant 0 : index
    %68 = vector.load %arg12[%c0_31, %c0_32] : memref<8x1xf32, #tpu.memory_space<vmem>>, vector<8x1xf32>
    tpu.vector_store %arg12[%c0_31, %c0_32], %67 {strides = array<i32>} : memref<8x1xf32, #tpu.memory_space<vmem>>, vector<8x1xf32>,
    %cst_33 = arith.constant 3.000000e+01 : f32
    %69 = vector.broadcast %cst_33 : f32 to vector<8x128xf32>
    %70 = arith.mulf %13, %69 : vector<8x128xf32>
    %c0_34 = arith.constant 0 : index
    %c0_35 = arith.constant 0 : index
    %71 = vector.load %arg7[%c0_34, %c0_35] : memref<8x128xf32, #tpu.memory_space<vmem>>, vector<8x128xf32>
    tpu.vector_store %arg7[%c0_34, %c0_35], %70 {strides = array<i32>} : memref<8x128xf32, #tpu.memory_space<vmem>>, vector<8x128xf32>,
    %c0_i32_36 = arith.constant 0 : i32
    %72 = arith.cmpi eq, %arg1, %c0_i32_36 : i32
    %73 = arith.extui %72 : i1 to i32
    %c0_i32_37 = arith.constant 0 : i32
    %74 = arith.cmpi ne, %73, %c0_i32_37 : i32
    scf.if %74 {
      %c0_38 = arith.constant 0 : index
      %c0_39 = arith.constant 0 : index
      %75 = vector.load %arg10[%c0_38, %c0_39] : memref<8x1xf32, #tpu.memory_space<vmem>>, vector<8x1xf32>
      %c0_40 = arith.constant 0 : index
      %c0_41 = arith.constant 0 : index
      %76 = vector.load %arg11[%c0_40, %c0_41] : memref<8x1xf32, #tpu.memory_space<vmem>>, vector<8x1xf32>
      %77 = math.log %76 : vector<8x1xf32>
      %78 = arith.addf %75, %77 : vector<8x1xf32>
      %c0_42 = arith.constant 0 : index
      %c0_43 = arith.constant 0 : index
      %79 = vector.load %arg12[%c0_42, %c0_43] : memref<8x1xf32, #tpu.memory_space<vmem>>, vector<8x1xf32>
      %80 = arith.subf %78, %79 : vector<8x1xf32>
      %81 = vector.shape_cast %80 : vector<8x1xf32> to vector<8x1xf32>
      %82 = vector.broadcast %81 : vector<8x1xf32> to vector<8x128xf32>
      %c0_44 = arith.constant 0 : index
      %c0_45 = arith.constant 0 : index
      %83 = vector.load %arg8[%c0_44, %c0_45] : memref<8x128xf32, #tpu.memory_space<vmem>>, vector<8x128xf32>
      tpu.vector_store %arg8[%c0_44, %c0_45], %82 {strides = array<i32>} : memref<8x128xf32, #tpu.memory_space<vmem>>, vector<8x128xf32>,
    } else {
    }
    return
  }
  func.func @transform_0(%arg0: i32, %arg1: i32) -> (i32, i32) {
    %c0_i32 = arith.constant 0 : i32
    %c0_i32_0 = arith.constant 0 : i32
    return %arg0, %c0_i32 : i32, i32
  }
  func.func @transform_1(%arg0: i32, %arg1: i32) -> (i32, i32) {
    %c0_i32 = arith.constant 0 : i32
    %c0_i32_0 = arith.constant 0 : i32
    %c0_i32_1 = arith.constant 0 : i32
    return %c0_i32, %c0_i32_0 : i32, i32
  }
  func.func @transform_2(%arg0: i32, %arg1: i32) -> (i32, i32) {
    %c0_i32 = arith.constant 0 : i32
    %c0_i32_0 = arith.constant 0 : i32
    %c0_i32_1 = arith.constant 0 : i32
    return %c0_i32, %c0_i32_0 : i32, i32
  }
  func.func @transform_3(%arg0: i32, %arg1: i32) -> (i32, i32) {
    %c0_i32 = arith.constant 0 : i32
    %c0_i32_0 = arith.constant 0 : i32
    return %c0_i32, %arg1 : i32, i32
  }
  func.func @transform_4(%arg0: i32, %arg1: i32) -> (i32, i32) {
    %c0_i32 = arith.constant 0 : i32
    %c0_i32_0 = arith.constant 0 : i32
    return %arg0, %c0_i32 : i32, i32
  }
  func.func @transform_5(%arg0: i32, %arg1: i32) -> (i32, i32) {
    %c0_i32 = arith.constant 0 : i32
    return %arg0, %arg1 : i32, i32
  }
  func.func @transform_6(%arg0: i32, %arg1: i32) -> (i32, i32) {
    %c0_i32 = arith.constant 0 : i32
    %c0_i32_0 = arith.constant 0 : i32
    return %arg0, %c0_i32 : i32, i32
  }
}

</mosaic_0001>

<llo_original>
// kernel: tpu_custom_call.1
$region0: #{tpu_custom_call.1}
  #allocation0 [shape = 'u32[]', space=smem, size = 0x4, offset = 0x4, fixed_abs, tag = 'smem constant byte address 0x4 - core index']
  #allocation1 [shape = 'u32[72,128]{1,0:T(1,128)}', space=vmem, size = 0x9000, scoped, tag = 'internal scratch']
  #allocation2 [shape = 'f32[8,16]{1,0:T(8,128)}', space=vmem, size = 0x1000, scoped, tag = 'scratch operand']
  #allocation3 [shape = 'f32[8,1]{1,0:T(8,128)}', space=vmem, size = 0x1000, scoped, tag = 'scratch operand']
  #allocation4 [shape = 'f32[8,1]{1,0:T(8,128)}', space=vmem, size = 0x1000, scoped, tag = 'scratch operand']
  #allocation5 [shape = 'f32[8,1]{1,0:T(8,128)}', space=vmem, size = 0x1000, scoped, tag = 'scratch operand']
  %s0 = inlined_call_operand.vmem [shape: f32[8,32], index: 0, kind: input, shape index: {}]
  %s1 = inlined_call_operand.vmem [shape: f32[32,16], index: 1, kind: input, shape index: {}]
  %s2 = inlined_call_operand.vmem [shape: f32[1,16], index: 2, kind: input, shape index: {}]
  %s3 = inlined_call_operand.vmem [shape: f32[16,128], index: 3, kind: input, shape index: {}]
  %s4 = inlined_call_operand.vmem [shape: s32[8,1], index: 4, kind: input, shape index: {}]
  %s5 = inlined_call_operand.hbm [shape: f32[8,128], index: 5, kind: output, shape index: {0}]
  %s6 = inlined_call_operand.hbm [shape: f32[8,128], index: 6, kind: output, shape index: {1}]
  %7 = xla_tuple %s5, %s6
  %s8 = sld [smem:[#allocation0]]
  $region46: #{tpu_custom_call.1} parent=0
    _
  %s10 = ssub.s32 1, %s8
  %s11 = scalar_select 0, %s10, %s8
  $region1: #{tpu_custom_call.1} parent=0
    #allocation6 [shape = 'u8[4096]{0}', space=vmem, size = 0x1000, scoped, tag = 'output window, operand 0, single buffered']
    #allocation7 [shape = 's32[1]{0}', space=sflag, size = 0x4, scoped, tag = 'scoped memory for tpu_custom_call.1']
    #allocation8 [shape = 'u8[4096]{0}', space=vmem, size = 0x1000, scoped, tag = 'output window, operand 1, single buffered']
    #allocation9 [shape = 's32[1]{0}', space=sflag, size = 0x4, scoped, tag = 'scoped memory for tpu_custom_call.1']
    %12 = vsyncpa [#allocation7], 0
    %13 = vsyncpa [#allocation9], 0
    // Predicated region
    $region2: #{tpu_custom_call.1} parent=1 // pred_check
      _
    $region3: #{tpu_custom_call.1} parent=1 // pred_check_branch
      %15 = sbr.rel (0) target = $region5
    $region4: #{tpu_custom_call.1} parent=1 // pred_region
      _
    $region5: #{tpu_custom_call.1} parent=1 // pred_fallthru
      _
    // Predicated region
    $region6: #{tpu_custom_call.1} parent=1 // pred_check
      _
    $region7: #{tpu_custom_call.1} parent=1 // pred_check_branch
      %17 = sbr.rel (0) target = $region9
    $region8: #{tpu_custom_call.1} parent=1 // pred_region
      _
    $region9: #{tpu_custom_call.1} parent=1 // pred_fallthru
      _
    // Predicated region
    $region10: #{tpu_custom_call.1} parent=1 // pred_check
      _
    $region11: #{tpu_custom_call.1} parent=1 // pred_check_branch
      %19 = sbr.rel (0) target = $region13
    $region12: #{tpu_custom_call.1} parent=1 // pred_region
      _
    $region13: #{tpu_custom_call.1} parent=1 // pred_fallthru
      _
    // Predicated region
    $region14: #{tpu_custom_call.1} parent=1 // pred_check
      _
    $region15: #{tpu_custom_call.1} parent=1 // pred_check_branch
      %21 = sbr.rel (0) target = $region17
    $region16: #{tpu_custom_call.1} parent=1 // pred_region
      _
    $region17: #{tpu_custom_call.1} parent=1 // pred_fallthru
      _
    // Predicated region
    $region18: #{tpu_custom_call.1} parent=1 // pred_check
      _
    $region19: #{tpu_custom_call.1} parent=1 // pred_check_branch
      %23 = sbr.rel (0) target = $region21
    $region20: #{tpu_custom_call.1} parent=1 // pred_region
      _
    $region21: #{tpu_custom_call.1} parent=1 // pred_fallthru
      _
    %p24 = scmp.eq.s32.totalorder 0, 0
    // Predicated region
    $region22: #{tpu_custom_call.1} parent=1 // pred_check
      %p25 = pneg %p24
    $region23: #{tpu_custom_call.1} parent=1 // pred_check_branch
      %27 = sbr.rel (%p25) target = $region25
    $region24: #{tpu_custom_call.1} parent=1 // pred_region
      %v28 = vld [vmem:[%s0] sm:$0xff]
      %v29 = vld [vmem:[%s1] sm:$0xff]
      %v30 = vld [vmem:[%s1 + $0x8] sm:$0xff]
      %v31 = vld [vmem:[%s1 + $0x10] sm:$0xff]
      %v32 = vld [vmem:[%s1 + $0x18] sm:$0xff]
      %v33 = vld [vmem:[%s2] sm:$0x1]
      %v35 = vperm.slane %v33, 0
      %vm37 = vcmask 261120
      %v39 = vsel %vm37, %v28, 0
      %41 = vmatpush.msra.mxu0 0.0
      %42 = vmatpush.msra.mxu0 0.0
      %43 = vmatpush.msra.mxu0 0.0
      %44 = vmatpush.msra.mxu0 0.0
      %45 = vmatpush.msra.mxu0 0.0
      %46 = vmatpush.msra.mxu0 0.0
      %47 = vmatpush.msra.mxu0 0.0
      %48 = vmatpush.msra.mxu0 0.0
      %49 = vmatpush.msra.mxu0 0.0
      %50 = vmatpush.msra.mxu0 0.0
      %51 = vmatpush.msra.mxu0 0.0
      %52 = vmatpush.msra.mxu0 0.0
      %53 = vmatpush.msra.mxu0 %v32
      %54 = vmatpush.msra.mxu0 %v31
      %55 = vmatpush.msra.mxu0 %v30
      %56 = vmatpush.msra.mxu0 %v29
      %57 = vmatmul.f32.gmra.mxu0 %v39
      %v58 = vpop.f32.mrf.mxu0
      %v59 = vadd.f32 %v35, %v58
      %60 = vdwg.mxu0
      %v61 = vmul.f32 %v59, %v59
      %vm62 = vcmask 130048
      %v63 = vsel %vm62, %v61, 0.0
      %64 = vadd.xlane.f32.xlu0 %v63
      %v65 = vpop.xlane.xlu0 %64
      %v66 = vmax.f32 %v65, 1e-24
      %v67 = vrsqrt.pop %v66
      %v68 = vmul.f32 %v67, %v66
      %v69 = vmul.f32 %v68, %v67
      %v70 = vmul.f32 0.5, %v69
      %v71 = vsub.f32 1.5, %v70
      %v72 = vmul.f32 %v67, %v71
      %vm73 = vweird.f32 %v66
      %vm74 = vweird.f32 %v67
      %vm75 = vmor %vm73, %vm74
      %v76 = vsel %vm75, %v67, %v72
      %v77 = vmul.f32 %v59, %v76
      %78 = vst.msk [vmem:[#allocation2] sm:$0xff] %vm62, %v77
      %vm79 = vcmask 7168
      %80 = vst.msk [vmem:[#allocation3] sm:$0xff] %vm79, -inf
      %81 = vst.msk [vmem:[#allocation4] sm:$0xff] %vm79, 0.0
      %82 = vst.msk [vmem:[#allocation5] sm:$0xff] %vm79, 0.0
    $region25: #{tpu_custom_call.1} parent=1 // pred_fallthru
      _
    %v83 = vld [vmem:[%s3] sm:$0xff]
    %v84 = vld [vmem:[%s3 + $0x8] sm:$0xff]
    %v85 = vmul.f32 %v83, %v83
    %v86 = vmul.f32 %v84, %v84
    %v87 = vadd.f32 %v85, %v86
    %v88 = vrot.slane %v87, 4
    %v89 = vadd.f32 %v87, %v88
    %v90 = vrot.slane %v89, 2
    %v91 = vadd.f32 %v89, %v90
    %v92 = vrot.slane %v91, 1
    %v93 = vadd.f32 %v91, %v92
    %v94 = vmax.f32 %v93, 1e-24
    %v95 = vrsqrt.pop %v94
    %v96 = vmul.f32 %v95, %v94
    %v97 = vmul.f32 %v96, %v95
    %v98 = vmul.f32 0.5, %v97
    %v99 = vsub.f32 1.5, %v98
    %v100 = vmul.f32 %v95, %v99
    %vm101 = vweird.f32 %v94
    %vm102 = vweird.f32 %v95
    %vm103 = vmor %vm101, %vm102
    %v104 = vsel %vm103, %v95, %v100
    %v105 = vmul.f32 %v83, %v104
    %v106 = vmul.f32 %v84, %v104
    %v107 = vld [vmem:[#allocation2] sm:$0xff]
    %vm108 = vcmask 130048
    %v110 = vsel %vm108, %v107, 0
    %112 = vmatpush.msra.mxu0 0.0
    %113 = vmatpush.msra.mxu0 0.0
    %114 = vmatpush.msra.mxu0 0.0
    %115 = vmatpush.msra.mxu0 0.0
    %116 = vmatpush.msra.mxu0 0.0
    %117 = vmatpush.msra.mxu0 0.0
    %118 = vmatpush.msra.mxu0 0.0
    %119 = vmatpush.msra.mxu0 0.0
    %120 = vmatpush.msra.mxu0 0.0
    %121 = vmatpush.msra.mxu0 0.0
    %122 = vmatpush.msra.mxu0 0.0
    %123 = vmatpush.msra.mxu0 0.0
    %124 = vmatpush.msra.mxu0 0.0
    %125 = vmatpush.msra.mxu0 0.0
    %126 = vmatpush.msra.mxu0 %v106
    %127 = vmatpush.msra.mxu0 %v105
    %128 = vmatmul.f32.gmra.mxu0 %v110
    %v129 = vpop.f32.mrf.mxu0
    %v130 = vadd.f32 0.0, %v129
    %131 = vdwg.mxu0
    %v132 = vmul.f32 %v130, %v130
    %v133 = vsub.f32 1.0, %v132
    %v134 = vmax.f32 %v133, 0.0
    %v135 = vmin.f32 %v134, 1.0
    %v136 = vrsqrt.pop %v135
    %v137 = vmul.f32 %v136, %v135
    %v138 = vmul.f32 %v137, %v136
    %v139 = vmul.f32 0.5, %v138
    %v140 = vsub.f32 1.5, %v139
    %v141 = vmul.f32 %v136, %v140
    %v142 = vmul.f32 %v135, %v141
    %vm143 = vcmp.eq.f32.partialorder %v135, inf
    %v144 = vsel %vm143, %v135, %v142
    %vm145 = vcmp.eq.f32.partialorder %v135, 0.0
    %v146 = vand.u32 %v135, 2147483648
    %v147 = vsel %vm145, %v146, %v144
    %v148 = vmul.f32 %v130, 0.87758255
    %v149 = vmul.f32 %v147, 0.47942555
    %v150 = vsub.f32 %v148, %v149
    %vm151 = vcmp.gt.f32.partialorder %v130, -0.87758255
    %v152 = vsub.f32 %v130, 0.23971277
    %v153 = vsel %vm151, %v150, %v152
    %v154 = vlaneseq
    %v155 = vand.u32 %v154, 127
    %s156 = smul.u32 0, 128
    %v157 = vstv %s156
    %v158 = vadd.s32 %v155, %v157
    %v159 = vld [vmem:[%s4] sm:$0xff]
    %160 = vset.pattern.permute.xlu0 0
    %161 = vperm.xlu0 %160, %v159
    %v162 = vpop.permute.xlu0 %161
    %vm163 = vcmp.eq.s32.totalorder %v158, %v162
    %vm164 = vcmp.lt.s32.totalorder %v158, 8
    %v165 = vsel %vm163, %v153, %v130
    %v166 = vmul.f32 %v165, 30.0
    %v167 = vsel %vm164, %v166, -inf
    %v168 = vld [vmem:[#allocation3] sm:$0xff]
    %169 = vmax.xlane.f32.xlu0 %v167
    %v170 = vpop.xlane.xlu0 %169
    %v171 = vmax.f32 %v168, %v170
    %v172 = vsub.f32 %v168, %v171
    %v173 = vmul.f32 %v172, 1.442695
    %v174 = vpow.pop %v173
    %176 = vset.pattern.permute.xlu0 0
    %177 = vperm.xlu0 %176, %v171
    %v178 = vpop.permute.xlu0 %177
    %v180 = vsub.f32 %v167, %v178
    %v181 = vmul.f32 %v180, 1.442695
    %v182 = vpow.pop %v181
    %v183 = vld [vmem:[#allocation4] sm:$0xff]
    %v184 = vmul.f32 %v174, %v183
    %185 = vadd.xlane.f32.xlu0 %v182
    %v186 = vpop.xlane.xlu0 %185
    %v187 = vadd.f32 %v184, %v186
    %vm188 = vcmask 7168
    %189 = vst.msk [vmem:[#allocation4] sm:$0xff] %vm188, %v187
    %190 = vst.msk [vmem:[#allocation3] sm:$0xff] %vm188, %v171
    %v191 = vld [vmem:[#allocation5] sm:$0xff]
    %v192 = vsel %vm163, %v166, 0.0
    %193 = vadd.xlane.f32.xlu0 %v192
    %v194 = vpop.xlane.xlu0 %193
    %v195 = vadd.f32 %v191, %v194
    %196 = vst.msk [vmem:[#allocation5] sm:$0xff] %vm188, %v195
    %v197 = vmul.f32 %v130, 30.0
    %198 = vst [vmem:[#allocation6] sm:$0xff] %v197
    // Predicated region
    $region26: #{tpu_custom_call.1} parent=1 // pred_check
      %p199 = pneg %p24
    $region27: #{tpu_custom_call.1} parent=1 // pred_check_branch
      %201 = sbr.rel (%p199) target = $region29
    $region28: #{tpu_custom_call.1} parent=1 // pred_region
      %v202 = vld [vmem:[#allocation3] sm:$0xff]
      %v203 = vld [vmem:[#allocation4] sm:$0xff]
      %v204 = vlog2.pop %v203
      %v205 = vmul.f32 %v204, 0.6931472
      %v206 = vadd.f32 %v202, %v205
      %v207 = vld [vmem:[#allocation5] sm:$0xff]
      %v208 = vsub.f32 %v206, %v207
      %210 = vset.pattern.permute.xlu0 0
      %211 = vperm.xlu0 %210, %v208
      %v212 = vpop.permute.xlu0 %211
      %214 = vst [vmem:[#allocation8] sm:$0xff] %v212
    $region29: #{tpu_custom_call.1} parent=1 // pred_fallthru
      _
    // Predicated region
    $region30: #{tpu_custom_call.1} parent=1 // pred_check
      _
    $region31: #{tpu_custom_call.1} parent=1 // pred_check_branch
      %216 = sbr.rel (0) target = $region33
    $region32: #{tpu_custom_call.1} parent=1 // pred_region
      %218 = vsyncadd [#allocation7], 0
      %s220 = sshll.u32 [#allocation6], 4
      %s221 = int_to_ptr.vmem [resolvable:$true] %s220
      %s222 = sshll.u32 %s5, 4
      %s223 = int_to_ptr.hbm [resolvable:$true] %s222
      %225 = dma.vmem_to_hbm [thread:$0]  %s221, 128, %s223, [#allocation7]
    $region33: #{tpu_custom_call.1} parent=1 // pred_fallthru
      _
    // Predicated region
    $region34: #{tpu_custom_call.1} parent=1 // pred_check
      _
    $region35: #{tpu_custom_call.1} parent=1 // pred_check_branch
      %227 = sbr.rel (0) target = $region37
    $region36: #{tpu_custom_call.1} parent=1 // pred_region
      %229 = vsyncadd [#allocation9], 0
      %s231 = sshll.u32 [#allocation8], 4
      %s232 = int_to_ptr.vmem [resolvable:$true] %s231
      %s233 = sshll.u32 %s6, 4
      %s234 = int_to_ptr.hbm [resolvable:$true] %s233
      %236 = dma.vmem_to_hbm [thread:$0]  %s232, 128, %s234, [#allocation9]
    $region37: #{tpu_custom_call.1} parent=1 // pred_fallthru
      _
    // Predicated region
    $region38: #{tpu_custom_call.1} parent=1 // pred_check
      _
    $region39: #{tpu_custom_call.1} parent=1 // pred_check_branch
      %238 = sbr.rel (0) target = $region41
    $region40: #{tpu_custom_call.1} parent=1 // pred_region
      %240 = dma.done [#allocation7], 128
    $region41: #{tpu_custom_call.1} parent=1 // pred_fallthru
      _
    // Predicated region
    $region42: #{tpu_custom_call.1} parent=1 // pred_check
      _
    $region43: #{tpu_custom_call.1} parent=1 // pred_check_branch
      %242 = sbr.rel (0) target = $region45
    $region44: #{tpu_custom_call.1} parent=1 // pred_region
      %244 = dma.done [#allocation9], 128
    $region45: #{tpu_custom_call.1} parent=1 // pred_fallthru
      _
    %245 = vsyncpa [#allocation7], 1
    %246 = vsyncpa [#allocation9], 1

</llo_original>
